<compile_context>
chip_gen: v7x
topology: tpu7x:2x2x1
jax: 0.10.0
libtpu: 0.0.40
codegen_flags: <defaults>
</compile_context>

<pallas_src>
import jax
import jax.numpy as jnp
from jax.experimental import pallas as pl
from jax.experimental.pallas import tpu as pltpu

LANE = 128   # TPU lane width
TB = 8       # images per stem grid step (sublane-dense)


def _pad_axis_to(a, axis, size):
    pad = size - a.shape[axis]
    if pad <= 0:
        return a
    widths = [(0, 0)] * a.ndim
    widths[axis] = (0, pad)
    return jnp.pad(a, widths)


def _round_up(n, m):
    return pl.cdiv(n, m) * m


# ---------------------------------------------------------------------------
# Kernel 1: conv stem (im2col matmul, bf16 in / f32 acc) + SiLU + global avg pool
# ---------------------------------------------------------------------------
def _stem_pool_kernel(p_ref, w_ref, b_ref, pool_ref, o_ref):
    # p_ref:    (TB*P, Kp)  bf16 im2col patches for TB images
    # w_ref:    (Kp, Cp)    bf16 stem weights (K and C_stem zero-padded to 128)
    # b_ref:    (1, Cp)     f32 bias
    # pool_ref: (TB, TB*P)  f32 block-diagonal averaging matrix (entries 1/P)
    # o_ref:    (TB, Cp)    f32 pooled features
    y = jnp.dot(p_ref[...], w_ref[...], preferred_element_type=jnp.float32)
    y = y + b_ref[...]
    y = y * jax.nn.sigmoid(y)                                   # SiLU (EfficientNet act)
    # Global average pool per image as an MXU matmul (sum * 1/P folded into pool matrix).
    o_ref[...] = jnp.dot(pool_ref[...], y, preferred_element_type=jnp.float32)


def stem_features(x, w_stem, b_stem):
    """x: (B, C, H, W) NCHW -> features (B_pad, C_pad) f32.

    3x3 conv, stride 2, pad 1, SiLU, global average pool.  Valid rows are [:B],
    valid feature columns are [:C_stem]; padded feature columns are exactly zero.
    """
    B, C, H, W = x.shape
    Hout, Wout = H // 2, W // 2
    P, K = Hout * Wout, C * 9
    C_stem = w_stem.shape[1]

    # im2col in the wrapper (see TODO(synk) above about in-kernel extraction).
    xp = jnp.pad(x, ((0, 0), (0, 0), (1, 1), (1, 1)))
    cols = []
    for dh in range(3):
        for dw in range(3):
            cols.append(xp[:, :, dh:dh + 2 * Hout:2, dw:dw + 2 * Wout:2])  # (B, C, Hout, Wout)
    patches = jnp.stack(cols, axis=-1)                 # (B, C, Hout, Wout, 9)
    patches = patches.transpose(0, 2, 3, 1, 4)         # (B, Hout, Wout, C, 9)
    patches = patches.reshape(B, P, K)

    # Pad contraction dim K -> multiple of 128 lanes, batch -> multiple of TB,
    # feature dim -> multiple of 128; cast the big operands to bf16 (f32 accum on MXU).
    Kp = _round_up(K, LANE)
    Cp = _round_up(C_stem, LANE)
    Bp = _round_up(B, TB)
    patches = _pad_axis_to(_pad_axis_to(patches, 2, Kp), 0, Bp)
    patches = patches.reshape(Bp * P, Kp).astype(jnp.bfloat16)
    w = _pad_axis_to(_pad_axis_to(w_stem, 0, Kp), 1, Cp).astype(jnp.bfloat16)
    b = _pad_axis_to(b_stem.reshape(1, C_stem), 1, Cp).astype(jnp.float32)
    # Block-diagonal pooling matrix: pool[i, i*P:(i+1)*P] = 1/P.
    pool = jnp.kron(jnp.eye(TB, dtype=jnp.float32),
                    jnp.full((1, P), 1.0 / P, jnp.float32))          # (TB, TB*P)

    return pl.pallas_call(
        _stem_pool_kernel,
        out_shape=jax.ShapeDtypeStruct((Bp, Cp), jnp.float32),
        grid=(Bp // TB,),
        in_specs=[
            pl.BlockSpec((TB * P, Kp), lambda g: (g, 0)),
            pl.BlockSpec((Kp, Cp), lambda g: (0, 0)),     # constant index -> stays resident
            pl.BlockSpec((1, Cp), lambda g: (0, 0)),
            pl.BlockSpec((TB, TB * P), lambda g: (0, 0)),
        ],
        out_specs=pl.BlockSpec((TB, Cp), lambda g: (g, 0)),
        compiler_params=pltpu.CompilerParams(dimension_semantics=("parallel",)),
    )(patches, w, b, pool)


# ---------------------------------------------------------------------------
# Kernel 2: GRU stack (batch_first, seq_len=1, h0=0) + final Linear
# ---------------------------------------------------------------------------
def _make_rnn_fc_kernel(num_layers):
    def kernel(*refs):
        # refs: feat, then per layer (w_r, w_z, w_n, b_r, b_z, b_ni, b_nh),
        #       then w_fc, b_fc, out.
        x = refs[0][...]                                     # (Bp, D) f32
        idx = 1
        for _ in range(num_layers):
            w_r, w_z, w_n, b_r, b_z, b_ni, b_nh = refs[idx:idx + 7]
            idx += 7
            # seq_len == 1 and h0 == 0  =>  W_hh @ h is identically zero; gh == b_hh.
            r = jax.nn.sigmoid(jnp.dot(x, w_r[...], preferred_element_type=jnp.float32)
                               + b_r[...])
            z = jax.nn.sigmoid(jnp.dot(x, w_z[...], preferred_element_type=jnp.float32)
                               + b_z[...])
            n = jnp.tanh(jnp.dot(x, w_n[...], preferred_element_type=jnp.float32)
                         + b_ni[...] + r * b_nh[...])
            x = (1.0 - z) * n                                # h' = (1-z)*n + z*h0, h0 = 0
        w_fc_ref, b_fc_ref, out_ref = refs[idx], refs[idx + 1], refs[idx + 2]
        out_ref[...] = jnp.dot(x, w_fc_ref[...], preferred_element_type=jnp.float32) \
            + b_fc_ref[...]
    return kernel


def rnn_fc(features, gru_layers, w_fc_t, b_fc):
    """features: (Bp, D) f32; gru_layers: list of (Wih^T, Whh^T, bih, bhh).

    Whh matrices are never sent to the device kernel (zero contribution with h0=0).
    Returns (Bp, C_pad) logits; valid columns are [:num_classes].
    """
    Bp, D = features.shape
    num_classes = w_fc_t.shape[1]
    Cp = _round_up(num_classes, LANE)

    flat_inputs = [features]
    in_width = D
    for (wih, whh, bih, bhh) in gru_layers:
        del whh  # provably unused: h0 == 0 and seq_len == 1
        hidden = wih.shape[1] // 3
        # Split gates into lane-dense blocks (PyTorch gate order: r, z, n) and pad the
        # input rows of the first layer to the (zero-padded) feature width.
        w_r = _pad_axis_to(wih[:, 0 * hidden:1 * hidden], 0, in_width)
        w_z = _pad_axis_to(wih[:, 1 * hidden:2 * hidden], 0, in_width)
        w_n = _pad_axis_to(wih[:, 2 * hidden:3 * hidden], 0, in_width)
        b_r = bih[:, 0 * hidden:1 * hidden] + bhh[:, 0 * hidden:1 * hidden]
        b_z = bih[:, 1 * hidden:2 * hidden] + bhh[:, 1 * hidden:2 * hidden]
        b_ni = bih[:, 2 * hidden:3 * hidden]
        b_nh = bhh[:, 2 * hidden:3 * hidden]
        flat_inputs.extend([w_r, w_z, w_n, b_r, b_z, b_ni, b_nh])
        in_width = hidden

    w_fc_p = _pad_axis_to(w_fc_t, 1, Cp)
    b_fc_p = _pad_axis_to(b_fc.reshape(1, num_classes), 1, Cp)
    flat_inputs.extend([w_fc_p, b_fc_p])

    kernel = _make_rnn_fc_kernel(len(gru_layers))
    return pl.pallas_call(
        kernel,
        out_shape=jax.ShapeDtypeStruct((Bp, Cp), jnp.float32),
        in_specs=[pl.BlockSpec(memory_space=pltpu.MemorySpace.VMEM) for _ in flat_inputs],
        out_specs=pl.BlockSpec(memory_space=pltpu.MemorySpace.VMEM),
    )(*flat_inputs)


# ---------------------------------------------------------------------------
# Full forward: CNN features -> view(B, -1) -> unsqueeze(1) (seq_len=1) -> GRU -> fc
# ---------------------------------------------------------------------------
def seq_classifier_forward(x, params):
    B = x.shape[0]
    num_classes = params["w_fc"].shape[1]
    feats = stem_features(x, params["w_stem"], params["b_stem"])          # (Bp, 128*k)
    # unsqueeze(1) gives seq_len=1; rnn_output[:, -1, :] is exactly the single GRU step.
    logits_p = rnn_fc(feats, params["gru_layers"], params["w_fc"], params["b_fc"])
    return logits_p[:B, :num_classes]


if __name__ == "__main__":
    B, C, H, W = 2, 3, 16, 16
    input_size, hidden_size, num_classes, num_layers = 32, 32, 5, 2

    key = jax.random.PRNGKey(0)
    keys = jax.random.split(key, 16)

    x = jax.random.normal(keys[0], (B, C, H, W), jnp.float32)

    # Deterministic synthetic parameters (shapes follow the module's __init__).
    w_stem = 0.1 * jax.random.normal(keys[1], (C * 9, input_size), jnp.float32)
    b_stem = 0.1 * jax.random.normal(keys[2], (input_size,), jnp.float32)

    gru_layers = []
    kidx = 3
    in_dim = input_size
    for _ in range(num_layers):
        wih = 0.1 * jax.random.normal(keys[kidx], (in_dim, 3 * hidden_size), jnp.float32); kidx += 1
        whh = 0.1 * jax.random.normal(keys[kidx], (hidden_size, 3 * hidden_size), jnp.float32); kidx += 1
        bih = 0.1 * jax.random.normal(keys[kidx], (1, 3 * hidden_size), jnp.float32); kidx += 1
        bhh = 0.1 * jax.random.normal(keys[kidx], (1, 3 * hidden_size), jnp.float32); kidx += 1
        gru_layers.append((wih, whh, bih, bhh))
        in_dim = hidden_size

    w_fc = 0.1 * jax.random.normal(keys[kidx], (hidden_size, num_classes), jnp.float32); kidx += 1
    b_fc = 0.1 * jax.random.normal(keys[kidx], (num_classes,), jnp.float32)

    params = {"w_stem": w_stem, "b_stem": b_stem, "gru_layers": gru_layers,
              "w_fc": w_fc, "b_fc": b_fc}

    logits = seq_classifier_forward(x, params)
    jax.block_until_ready(logits)
    assert logits.shape == (B, num_classes)
    print("KERNEL_OK")
</pallas_src>

<mosaic_0001>
module attributes {stable_mosaic.version = 11 : i64} {
  func.func @_stem_pool_kernel(%arg0: i32, %arg1: memref<512x128xbf16, #tpu.memory_space<vmem>>, %arg2: memref<128x128xbf16, #tpu.memory_space<vmem>>, %arg3: memref<1x128xf32, #tpu.memory_space<vmem>>, %arg4: memref<8x512xf32, #tpu.memory_space<vmem>>, %arg5: memref<8x128xf32, #tpu.memory_space<vmem>>) attributes {dimension_semantics = [#tpu.dimension_semantics<parallel>], iteration_bounds = array<i64: 1>, scalar_prefetch = 0 : i64, scratch_operands = 0 : i64, tpu.core_type = #tpu.core_type<tc>, window_params = [{transform_indices = @transform_0, window_bounds = array<i64: 512, 128>}, {pipeline_mode = #tpu.pipeline_mode<synchronous>, transform_indices = @transform_1, window_bounds = array<i64: 128, 128>}, {pipeline_mode = #tpu.pipeline_mode<synchronous>, transform_indices = @transform_2, window_bounds = array<i64: 1, 128>}, {pipeline_mode = #tpu.pipeline_mode<synchronous>, transform_indices = @transform_3, window_bounds = array<i64: 8, 512>}, {transform_indices = @transform_4, window_bounds = array<i64: 8, 128>}]} {
    %c0 = arith.constant 0 : index
    %c0_0 = arith.constant 0 : index
    %0 = vector.load %arg1[%c0, %c0_0] : memref<512x128xbf16, #tpu.memory_space<vmem>>, vector<512x128xbf16>
    %c0_1 = arith.constant 0 : index
    %c0_2 = arith.constant 0 : index
    %1 = vector.load %arg2[%c0_1, %c0_2] : memref<128x128xbf16, #tpu.memory_space<vmem>>, vector<128x128xbf16>
    %cst = arith.constant dense<0.000000e+00> : vector<512x128xf32>
    %2 = tpu.matmul %0, %1, %cst {dimension_numbers = #tpu.dot_dimension_numbers<[1], [0], [0], [1], [0, 0, 1, 1], [], []>} : vector<512x128xbf16>, vector<128x128xbf16>, vector<512x128xf32> -> vector<512x128xf32>
    %c0_3 = arith.constant 0 : index
    %c0_4 = arith.constant 0 : index
    %3 = vector.load %arg3[%c0_3, %c0_4] : memref<1x128xf32, #tpu.memory_space<vmem>>, vector<1x128xf32>
    %4 = vector.broadcast %3 : vector<1x128xf32> to vector<512x128xf32>
    %5 = arith.addf %2, %4 : vector<512x128xf32>
    %6 = arith.negf %5 : vector<512x128xf32>
    %7 = math.exp %6 : vector<512x128xf32>
    %cst_5 = arith.constant 1.000000e+00 : f32
    %8 = vector.broadcast %cst_5 : f32 to vector<512x128xf32>
    %9 = arith.addf %8, %7 : vector<512x128xf32>
    %10 = arith.divf %8, %9 : vector<512x128xf32>
    %11 = arith.mulf %5, %10 : vector<512x128xf32>
    %c0_6 = arith.constant 0 : index
    %c0_7 = arith.constant 0 : index
    %12 = vector.load %arg4[%c0_6, %c0_7] : memref<8x512xf32, #tpu.memory_space<vmem>>, vector<8x512xf32>
    %cst_8 = arith.constant dense<0.000000e+00> : vector<8x128xf32>
    %13 = tpu.matmul %12, %11, %cst_8 {dimension_numbers = #tpu.dot_dimension_numbers<[1], [0], [0], [1], [0, 0, 1, 1], [], []>} : vector<8x512xf32>, vector<512x128xf32>, vector<8x128xf32> -> vector<8x128xf32>
    %c0_9 = arith.constant 0 : index
    %c0_10 = arith.constant 0 : index
    %14 = vector.load %arg5[%c0_9, %c0_10] : memref<8x128xf32, #tpu.memory_space<vmem>>, vector<8x128xf32>
    tpu.vector_store %arg5[%c0_9, %c0_10], %13 {strides = array<i32>} : memref<8x128xf32, #tpu.memory_space<vmem>>, vector<8x128xf32>,
    return
  }
  func.func @transform_0(%arg0: i32) -> (i32, i32) {
    %c0_i32 = arith.constant 0 : i32
    %c0_i32_0 = arith.constant 0 : i32
    return %arg0, %c0_i32 : i32, i32
  }
  func.func @transform_1(%arg0: i32) -> (i32, i32) {
    %c0_i32 = arith.constant 0 : i32
    %c0_i32_0 = arith.constant 0 : i32
    %c0_i32_1 = arith.constant 0 : i32
    return %c0_i32, %c0_i32_0 : i32, i32
  }
  func.func @transform_2(%arg0: i32) -> (i32, i32) {
    %c0_i32 = arith.constant 0 : i32
    %c0_i32_0 = arith.constant 0 : i32
    %c0_i32_1 = arith.constant 0 : i32
    return %c0_i32, %c0_i32_0 : i32, i32
  }
  func.func @transform_3(%arg0: i32) -> (i32, i32) {
    %c0_i32 = arith.constant 0 : i32
    %c0_i32_0 = arith.constant 0 : i32
    %c0_i32_1 = arith.constant 0 : i32
    return %c0_i32, %c0_i32_0 : i32, i32
  }
  func.func @transform_4(%arg0: i32) -> (i32, i32) {
    %c0_i32 = arith.constant 0 : i32
    %c0_i32_0 = arith.constant 0 : i32
    return %arg0, %c0_i32 : i32, i32
  }
}

</mosaic_0001>

<llo_original>
// kernel: tpu_custom_call.1
$region0: #{tpu_custom_call.1}
  #allocation0 [shape = 'u32[]', space=smem, size = 0x4, offset = 0x4, fixed_abs, tag = 'smem constant byte address 0x4 - core index']
  #allocation1 [shape = 'u32[144,128]{1,0:T(1,128)}', space=vmem, size = 0x12000, scoped, tag = 'internal scratch']
  %s0 = inlined_call_operand.hbm [shape: bf16[512,128], index: 0, kind: input, shape index: {}]
  %s1 = inlined_call_operand.hbm [shape: bf16[128,128], index: 1, kind: input, shape index: {}]
  %s2 = inlined_call_operand.vmem [shape: f32[1,128], index: 2, kind: input, shape index: {}]
  %s3 = inlined_call_operand.hbm [shape: f32[8,512], index: 3, kind: input, shape index: {}]
  %s4 = inlined_call_operand.hbm [shape: f32[8,128], index: 4, kind: output, shape index: {}]
  %s5 = sld [smem:[#allocation0]]
  $region38: #{tpu_custom_call.1} parent=0
    _
  %s7 = ssub.s32 1, %s5
  %s8 = scalar_select 0, %s7, %s5
  $region1: #{tpu_custom_call.1} parent=0
    #allocation2 [shape = 'u8[131072]{0}', space=vmem, size = 0x20000, scoped, tag = 'input window, operand 0, single buffered']
    #allocation3 [shape = 's32[1]{0}', space=sflag, size = 0x4, scoped, tag = 'scoped memory for tpu_custom_call.1']
    #allocation4 [shape = 's32[1]{0}', space=sflag, size = 0x4, scoped, tag = 'scoped memory for tpu_custom_call.1']
    #allocation5 [shape = 'u8[32768]{0}', space=vmem, size = 0x8000, scoped, tag = 'input window, operand 1, single buffered']
    #allocation6 [shape = 's32[1]{0}', space=sflag, size = 0x4, scoped, tag = 'scoped memory for tpu_custom_call.1']
    #allocation7 [shape = 'u8[16384]{0}', space=vmem, size = 0x4000, scoped, tag = 'input window, operand 3, single buffered']
    #allocation8 [shape = 'u8[4096]{0}', space=vmem, size = 0x1000, scoped, tag = 'output window, operand 0, single buffered']
    %9 = vsyncpa [#allocation3], 0
    %10 = vsyncpa [#allocation6], 0
    %11 = vsyncpa [#allocation4], 0
    // Predicated region
    $region2: #{tpu_custom_call.1} parent=1 // pred_check
      _
    $region3: #{tpu_custom_call.1} parent=1 // pred_check_branch
      %13 = sbr.rel (0) target = $region5
    $region4: #{tpu_custom_call.1} parent=1 // pred_region
      %s15 = ssub.s32 4096, 4096
      %16 = vsyncadd [#allocation3], %s15
      %s17 = sshll.u32 [#allocation2], 4
      %s18 = int_to_ptr.vmem [resolvable:$true] %s17
      %23 = dma.hbm_to_vmem [thread:$0]  %s0, 4096, %s18, [#allocation3], 64, 64, 4
    $region5: #{tpu_custom_call.1} parent=1 // pred_fallthru
      _
    // Predicated region
    $region6: #{tpu_custom_call.1} parent=1 // pred_check
      _
    $region7: #{tpu_custom_call.1} parent=1 // pred_check_branch
      %25 = sbr.rel (0) target = $region9
    $region8: #{tpu_custom_call.1} parent=1 // pred_region
      %s27 = ssub.s32 1024, 1024
      %28 = vsyncadd [#allocation6], %s27
      %s29 = sshll.u32 [#allocation5], 4
      %s30 = int_to_ptr.vmem [resolvable:$true] %s29
      %35 = dma.hbm_to_vmem [thread:$0]  %s1, 1024, %s30, [#allocation6], 64, 64, 4
    $region9: #{tpu_custom_call.1} parent=1 // pred_fallthru
      _
    // Predicated region
    $region10: #{tpu_custom_call.1} parent=1 // pred_check
      _
    $region11: #{tpu_custom_call.1} parent=1 // pred_check_branch
      %37 = sbr.rel (0) target = $region13
    $region12: #{tpu_custom_call.1} parent=1 // pred_region
      _
    $region13: #{tpu_custom_call.1} parent=1 // pred_fallthru
      _
    // Predicated region
    $region14: #{tpu_custom_call.1} parent=1 // pred_check
      _
    $region15: #{tpu_custom_call.1} parent=1 // pred_check_branch
      %39 = sbr.rel (0) target = $region17
    $region16: #{tpu_custom_call.1} parent=1 // pred_region
      %s41 = ssub.s32 512, 512
      %42 = vsyncadd [#allocation6], %s41
      %s44 = sshll.u32 [#allocation7], 4
      %s45 = int_to_ptr.vmem [resolvable:$true] %s44
      %47 = dma.hbm_to_vmem [thread:$0]  %s3, 512, %s45, [#allocation6]
    $region17: #{tpu_custom_call.1} parent=1 // pred_fallthru
      _
    // Predicated region
    $region18: #{tpu_custom_call.1} parent=1 // pred_check
      _
    $region19: #{tpu_custom_call.1} parent=1 // pred_check_branch
      %49 = sbr.rel (0) target = $region21
    $region20: #{tpu_custom_call.1} parent=1 // pred_region
      %50 = dma.done [#allocation3], 4096
    $region21: #{tpu_custom_call.1} parent=1 // pred_fallthru
      _
    // Predicated region
    $region22: #{tpu_custom_call.1} parent=1 // pred_check
      _
    $region23: #{tpu_custom_call.1} parent=1 // pred_check_branch
      %52 = sbr.rel (0) target = $region25
    $region24: #{tpu_custom_call.1} parent=1 // pred_region
      %53 = dma.done [#allocation6], 1024
    $region25: #{tpu_custom_call.1} parent=1 // pred_fallthru
      _
    // Predicated region
    $region26: #{tpu_custom_call.1} parent=1 // pred_check
      _
    $region27: #{tpu_custom_call.1} parent=1 // pred_check_branch
      %55 = sbr.rel (0) target = $region29
    $region28: #{tpu_custom_call.1} parent=1 // pred_region
      %56 = dma.done [#allocation6], 512
    $region29: #{tpu_custom_call.1} parent=1 // pred_fallthru
      _
    %v58 = vld [vmem:[#allocation2] sm:$0xf]
    %v59 = vld [vmem:[#allocation2 + $0x4] sm:$0xf]
    %v60 = vld [vmem:[#allocation2 + $0x8] sm:$0xf]
    %v61 = vld [vmem:[#allocation2 + $0xc] sm:$0xf]
    %v62 = vld [vmem:[#allocation2 + $0x10] sm:$0xf]
    %v63 = vld [vmem:[#allocation2 + $0x14] sm:$0xf]
    %v64 = vld [vmem:[#allocation2 + $0x18] sm:$0xf]
    %v65 = vld [vmem:[#allocation2 + $0x1c] sm:$0xf]
    %v66 = vld [vmem:[#allocation2 + $0x20] sm:$0xf]
    %v67 = vld [vmem:[#allocation2 + $0x24] sm:$0xf]
    %v68 = vld [vmem:[#allocation2 + $0x28] sm:$0xf]
    %v69 = vld [vmem:[#allocation2 + $0x2c] sm:$0xf]
    %v70 = vld [vmem:[#allocation2 + $0x30] sm:$0xf]
    %v71 = vld [vmem:[#allocation2 + $0x34] sm:$0xf]
    %v72 = vld [vmem:[#allocation2 + $0x38] sm:$0xf]
    %v73 = vld [vmem:[#allocation2 + $0x3c] sm:$0xf]
    %v74 = vld [vmem:[#allocation2 + $0x40] sm:$0xf]
    %v75 = vld [vmem:[#allocation2 + $0x44] sm:$0xf]
    %v76 = vld [vmem:[#allocation2 + $0x48] sm:$0xf]
    %v77 = vld [vmem:[#allocation2 + $0x4c] sm:$0xf]
    %v78 = vld [vmem:[#allocation2 + $0x50] sm:$0xf]
    %v79 = vld [vmem:[#allocation2 + $0x54] sm:$0xf]
    %v80 = vld [vmem:[#allocation2 + $0x58] sm:$0xf]
    %v81 = vld [vmem:[#allocation2 + $0x5c] sm:$0xf]
    %v82 = vld [vmem:[#allocation2 + $0x60] sm:$0xf]
    %v83 = vld [vmem:[#allocation2 + $0x64] sm:$0xf]
    %v84 = vld [vmem:[#allocation2 + $0x68] sm:$0xf]
    %v85 = vld [vmem:[#allocation2 + $0x6c] sm:$0xf]
    %v86 = vld [vmem:[#allocation2 + $0x70] sm:$0xf]
    %v87 = vld [vmem:[#allocation2 + $0x74] sm:$0xf]
    %v88 = vld [vmem:[#allocation2 + $0x78] sm:$0xf]
    %v89 = vld [vmem:[#allocation2 + $0x7c] sm:$0xf]
    %v90 = vld [vmem:[#allocation2 + $0x80] sm:$0xf]
    %v91 = vld [vmem:[#allocation2 + $0x84] sm:$0xf]
    %v92 = vld [vmem:[#allocation2 + $0x88] sm:$0xf]
    %v93 = vld [vmem:[#allocation2 + $0x8c] sm:$0xf]
    %v94 = vld [vmem:[#allocation2 + $0x90] sm:$0xf]
    %v95 = vld [vmem:[#allocation2 + $0x94] sm:$0xf]
    %v96 = vld [vmem:[#allocation2 + $0x98] sm:$0xf]
    %v97 = vld [vmem:[#allocation2 + $0x9c] sm:$0xf]
    %v98 = vld [vmem:[#allocation2 + $0xa0] sm:$0xf]
    %v99 = vld [vmem:[#allocation2 + $0xa4] sm:$0xf]
    %v100 = vld [vmem:[#allocation2 + $0xa8] sm:$0xf]
    %v101 = vld [vmem:[#allocation2 + $0xac] sm:$0xf]
    %v102 = vld [vmem:[#allocation2 + $0xb0] sm:$0xf]
    %v103 = vld [vmem:[#allocation2 + $0xb4] sm:$0xf]
    %v104 = vld [vmem:[#allocation2 + $0xb8] sm:$0xf]
    %v105 = vld [vmem:[#allocation2 + $0xbc] sm:$0xf]
    %v106 = vld [vmem:[#allocation2 + $0xc0] sm:$0xf]
    %v107 = vld [vmem:[#allocation2 + $0xc4] sm:$0xf]
    %v108 = vld [vmem:[#allocation2 + $0xc8] sm:$0xf]
    %v109 = vld [vmem:[#allocation2 + $0xcc] sm:$0xf]
    %v110 = vld [vmem:[#allocation2 + $0xd0] sm:$0xf]
    %v111 = vld [vmem:[#allocation2 + $0xd4] sm:$0xf]
    %v112 = vld [vmem:[#allocation2 + $0xd8] sm:$0xf]
    %v113 = vld [vmem:[#allocation2 + $0xdc] sm:$0xf]
    %v114 = vld [vmem:[#allocation2 + $0xe0] sm:$0xf]
    %v115 = vld [vmem:[#allocation2 + $0xe4] sm:$0xf]
    %v116 = vld [vmem:[#allocation2 + $0xe8] sm:$0xf]
    %v117 = vld [vmem:[#allocation2 + $0xec] sm:$0xf]
    %v118 = vld [vmem:[#allocation2 + $0xf0] sm:$0xf]
    %v119 = vld [vmem:[#allocation2 + $0xf4] sm:$0xf]
    %v120 = vld [vmem:[#allocation2 + $0xf8] sm:$0xf]
    %v121 = vld [vmem:[#allocation2 + $0xfc] sm:$0xf]
    %v122 = vld [vmem:[#allocation5] sm:$0xf]
    %v123 = vld [vmem:[#allocation5 + $0x4] sm:$0xf]
    %v124 = vld [vmem:[#allocation5 + $0x8] sm:$0xf]
    %v125 = vld [vmem:[#allocation5 + $0xc] sm:$0xf]
    %v126 = vld [vmem:[#allocation5 + $0x10] sm:$0xf]
    %v127 = vld [vmem:[#allocation5 + $0x14] sm:$0xf]
    %v128 = vld [vmem:[#allocation5 + $0x18] sm:$0xf]
    %v129 = vld [vmem:[#allocation5 + $0x1c] sm:$0xf]
    %v130 = vld [vmem:[#allocation5 + $0x20] sm:$0xf]
    %v131 = vld [vmem:[#allocation5 + $0x24] sm:$0xf]
    %v132 = vld [vmem:[#allocation5 + $0x28] sm:$0xf]
    %v133 = vld [vmem:[#allocation5 + $0x2c] sm:$0xf]
    %v134 = vld [vmem:[#allocation5 + $0x30] sm:$0xf]
    %v135 = vld [vmem:[#allocation5 + $0x34] sm:$0xf]
    %v136 = vld [vmem:[#allocation5 + $0x38] sm:$0xf]
    %v137 = vld [vmem:[#allocation5 + $0x3c] sm:$0xf]
    %v138 = vld [vmem:[%s2] sm:$0x1]
    %v140 = vlaneseq
    %v141 = vshrl.u32 %v140, 7
    %v142 = vsub.s32 0, %v141
    %v143 = vrot.slane %v138, %v142
    %v209 = vunpack.c.l.b16 %v58
    %v210 = vunpack.c.l.b16 %v59
    %v211 = vunpack.c.l.b16 %v60
    %v212 = vunpack.c.l.b16 %v61
    %v213 = vunpack.c.l.b16 %v62
    %v214 = vunpack.c.l.b16 %v63
    %v215 = vunpack.c.l.b16 %v64
    %v216 = vunpack.c.l.b16 %v65
    %v217 = vunpack.c.l.b16 %v66
    %v218 = vunpack.c.l.b16 %v67
    %v219 = vunpack.c.l.b16 %v68
    %v220 = vunpack.c.l.b16 %v69
    %v221 = vunpack.c.l.b16 %v70
    %v222 = vunpack.c.l.b16 %v71
    %v223 = vunpack.c.l.b16 %v72
    %v224 = vunpack.c.l.b16 %v73
    %v225 = vunpack.c.l.b16 %v74
    %v226 = vunpack.c.l.b16 %v75
    %v227 = vunpack.c.l.b16 %v76
    %v228 = vunpack.c.l.b16 %v77
    %v229 = vunpack.c.l.b16 %v78
    %v230 = vunpack.c.l.b16 %v79
    %v231 = vunpack.c.l.b16 %v80
    %v232 = vunpack.c.l.b16 %v81
    %v233 = vunpack.c.l.b16 %v82
    %v234 = vunpack.c.l.b16 %v83
    %v235 = vunpack.c.l.b16 %v84
    %v236 = vunpack.c.l.b16 %v85
    %v237 = vunpack.c.l.b16 %v86
    %v238 = vunpack.c.l.b16 %v87
    %v239 = vunpack.c.l.b16 %v88
    %v240 = vunpack.c.l.b16 %v89
    %v241 = vunpack.c.l.b16 %v90
    %v242 = vunpack.c.l.b16 %v91
    %v243 = vunpack.c.l.b16 %v92
    %v244 = vunpack.c.l.b16 %v93
    %v245 = vunpack.c.l.b16 %v94
    %v246 = vunpack.c.l.b16 %v95
    %v247 = vunpack.c.l.b16 %v96
    %v248 = vunpack.c.l.b16 %v97
    %v249 = vunpack.c.l.b16 %v98
    %v250 = vunpack.c.l.b16 %v99
    %v251 = vunpack.c.l.b16 %v100
    %v252 = vunpack.c.l.b16 %v101
    %v253 = vunpack.c.l.b16 %v102
    %v254 = vunpack.c.l.b16 %v103
    %v255 = vunpack.c.l.b16 %v104
    %v256 = vunpack.c.l.b16 %v105
    %v257 = vunpack.c.l.b16 %v106
    %v258 = vunpack.c.l.b16 %v107
    %v259 = vunpack.c.l.b16 %v108
    %v260 = vunpack.c.l.b16 %v109
    %v261 = vunpack.c.l.b16 %v110
    %v262 = vunpack.c.l.b16 %v111
    %v263 = vunpack.c.l.b16 %v112
    %v264 = vunpack.c.l.b16 %v113
    %v265 = vunpack.c.l.b16 %v114
    %v266 = vunpack.c.l.b16 %v115
    %v267 = vunpack.c.l.b16 %v116
    %v268 = vunpack.c.l.b16 %v117
    %v269 = vunpack.c.l.b16 %v118
    %v270 = vunpack.c.l.b16 %v119
    %v271 = vunpack.c.l.b16 %v120
    %v272 = vunpack.c.l.b16 %v121
    %v273 = vpack.c.b16 %v210, %v209
    %v274 = vpack.c.b16 %v212, %v211
    %v275 = vpack.c.b16 %v214, %v213
    %v276 = vpack.c.b16 %v216, %v215
    %v277 = vpack.c.b16 %v218, %v217
    %v278 = vpack.c.b16 %v220, %v219
    %v279 = vpack.c.b16 %v222, %v221
    %v280 = vpack.c.b16 %v224, %v223
    %v281 = vpack.c.b16 %v226, %v225
    %v282 = vpack.c.b16 %v228, %v227
    %v283 = vpack.c.b16 %v230, %v229
    %v284 = vpack.c.b16 %v232, %v231
    %v285 = vpack.c.b16 %v234, %v233
    %v286 = vpack.c.b16 %v236, %v235
    %v287 = vpack.c.b16 %v238, %v237
    %v288 = vpack.c.b16 %v240, %v239
    %v289 = vpack.c.b16 %v242, %v241
    %v290 = vpack.c.b16 %v244, %v243
    %v291 = vpack.c.b16 %v246, %v245
    %v292 = vpack.c.b16 %v248, %v247
    %v293 = vpack.c.b16 %v250, %v249
    %v294 = vpack.c.b16 %v252, %v251
    %v295 = vpack.c.b16 %v254, %v253
    %v296 = vpack.c.b16 %v256, %v255
    %v297 = vpack.c.b16 %v258, %v257
    %v298 = vpack.c.b16 %v260, %v259
    %v299 = vpack.c.b16 %v262, %v261
    %v300 = vpack.c.b16 %v264, %v263
    %v301 = vpack.c.b16 %v266, %v265
    %v302 = vpack.c.b16 %v268, %v267
    %v303 = vpack.c.b16 %v270, %v269
    %v304 = vpack.c.b16 %v272, %v271
    %v353 = vunpack.c.l.b16 %v122
    %v354 = vunpack.c.l.b16 %v123
    %v355 = vunpack.c.l.b16 %v124
    %v356 = vunpack.c.l.b16 %v125
    %v357 = vunpack.c.l.b16 %v126
    %v358 = vunpack.c.l.b16 %v127
    %v359 = vunpack.c.l.b16 %v128
    %v360 = vunpack.c.l.b16 %v129
    %v361 = vunpack.c.l.b16 %v130
    %v362 = vunpack.c.l.b16 %v131
    %v363 = vunpack.c.l.b16 %v132
    %v364 = vunpack.c.l.b16 %v133
    %v365 = vunpack.c.l.b16 %v134
    %v366 = vunpack.c.l.b16 %v135
    %v367 = vunpack.c.l.b16 %v136
    %v368 = vunpack.c.l.b16 %v137
    %v369 = vpack.c.b16 %v354, %v353
    %v370 = vpack.c.b16 %v356, %v355
    %v371 = vpack.c.b16 %v358, %v357
    %v372 = vpack.c.b16 %v360, %v359
    %v373 = vpack.c.b16 %v362, %v361
    %v374 = vpack.c.b16 %v364, %v363
    %v375 = vpack.c.b16 %v366, %v365
    %v376 = vpack.c.b16 %v368, %v367
    %385 = vmatprep.subr.bf16.mxu0 0
    %386 = vmatpush1.bf16.msra.mxu0 %v369
    %387 = vmatprep.subr.bf16.mxu0 0
    %388 = vmatpush1.bf16.msra.mxu0 %v370
    %389 = vmatprep.subr.bf16.mxu0 0
    %390 = vmatpush1.bf16.msra.mxu0 %v371
    %391 = vmatprep.subr.bf16.mxu0 0
    %392 = vmatpush1.bf16.msra.mxu0 %v372
    %393 = vmatprep.subr.bf16.mxu0 0
    %394 = vmatpush1.bf16.msra.mxu0 %v373
    %395 = vmatprep.subr.bf16.mxu0 0
    %396 = vmatpush1.bf16.msra.mxu0 %v374
    %397 = vmatprep.subr.bf16.mxu0 0
    %398 = vmatpush1.bf16.msra.mxu0 %v375
    %399 = vmatprep.subr.bf16.mxu0 0
    %400 = vmatpush1.bf16.msra.mxu0 %v376
    %401 = vmatprep.subr.bf16.mxu0 0
    %402 = vmatpush1.bf16.msra.mxu0 0
    %403 = vmatprep.subr.bf16.mxu0 0
    %404 = vmatpush1.bf16.msra.mxu0 0
    %405 = vmatprep.subr.bf16.mxu0 0
    %406 = vmatpush1.bf16.msra.mxu0 0
    %407 = vmatprep.subr.bf16.mxu0 0
    %408 = vmatpush1.bf16.msra.mxu0 0
    %409 = vmatprep.subr.bf16.mxu0 0
    %410 = vmatpush1.bf16.msra.mxu0 0
    %411 = vmatprep.subr.bf16.mxu0 0
    %412 = vmatpush1.bf16.msra.mxu0 0
    %413 = vmatprep.subr.bf16.mxu0 0
    %414 = vmatpush1.bf16.msra.mxu0 0
    %415 = vmatprep.subr.bf16.mxu0 0
    %416 = vmatpush1.bf16.msra.mxu0 0
    %417 = vmatprep.mubr.bf16.mxu0 0
    %418 = vmatmul.mubr.bf16.gmra.mrb[0].mxu0 %v273
    %v419 = vpop.f32.mrb[0].mxu0
    %v420 = vadd.f32 %v143, %v419
    %v421 = vpop.f32.mrb[0].mxu0
    %v422 = vpop.f32.mrb[0].mxu0
    %v423 = vadd.f32 %v143, %v422
    %v424 = vpop.f32.mrb[0].mxu0
    %425 = vmatprep.mubr.bf16.mxu0 0
    %426 = vmatmul.mubr.bf16.gmra.mrb[0].mxu0 %v274
    %v427 = vpop.f32.mrb[0].mxu0
    %v428 = vadd.f32 %v143, %v427
    %v429 = vpop.f32.mrb[0].mxu0
    %v430 = vpop.f32.mrb[0].mxu0
    %v431 = vadd.f32 %v143, %v430
    %v432 = vpop.f32.mrb[0].mxu0
    %433 = vmatprep.mubr.bf16.mxu0 0
    %434 = vmatmul.mubr.bf16.gmra.mrb[0].mxu0 %v275
    %v435 = vpop.f32.mrb[0].mxu0
    %v436 = vadd.f32 %v143, %v435
    %v437 = vpop.f32.mrb[0].mxu0
    %v438 = vpop.f32.mrb[0].mxu0
    %v439 = vadd.f32 %v143, %v438
    %v440 = vpop.f32.mrb[0].mxu0
    %441 = vmatprep.mubr.bf16.mxu0 0
    %442 = vmatmul.mubr.bf16.gmra.mrb[0].mxu0 %v276
    %v443 = vpop.f32.mrb[0].mxu0
    %v444 = vadd.f32 %v143, %v443
    %v445 = vpop.f32.mrb[0].mxu0
    %v446 = vpop.f32.mrb[0].mxu0
    %v447 = vadd.f32 %v143, %v446
    %v448 = vpop.f32.mrb[0].mxu0
    %449 = vmatprep.mubr.bf16.mxu0 0
    %450 = vmatmul.mubr.bf16.gmra.mrb[0].mxu0 %v277
    %v451 = vpop.f32.mrb[0].mxu0
    %v452 = vadd.f32 %v143, %v451
    %v453 = vpop.f32.mrb[0].mxu0
    %v454 = vpop.f32.mrb[0].mxu0
    %v455 = vadd.f32 %v143, %v454
    %v456 = vpop.f32.mrb[0].mxu0
    %457 = vmatprep.mubr.bf16.mxu0 0
    %458 = vmatmul.mubr.bf16.gmra.mrb[0].mxu0 %v278
    %v459 = vpop.f32.mrb[0].mxu0
    %v460 = vadd.f32 %v143, %v459
    %v461 = vpop.f32.mrb[0].mxu0
    %v462 = vpop.f32.mrb[0].mxu0
    %v463 = vadd.f32 %v143, %v462
    %v464 = vpop.f32.mrb[0].mxu0
    %465 = vmatprep.mubr.bf16.mxu0 0
    %466 = vmatmul.mubr.bf16.gmra.mrb[0].mxu0 %v279
    %v467 = vpop.f32.mrb[0].mxu0
    %v468 = vadd.f32 %v143, %v467
    %v469 = vpop.f32.mrb[0].mxu0
    %v470 = vpop.f32.mrb[0].mxu0
    %v471 = vadd.f32 %v143, %v470
    %v472 = vpop.f32.mrb[0].mxu0
    %473 = vmatprep.mubr.bf16.mxu0 0
    %474 = vmatmul.mubr.bf16.gmra.mrb[0].mxu0 %v280
    %v475 = vpop.f32.mrb[0].mxu0
    %v476 = vadd.f32 %v143, %v475
    %v477 = vpop.f32.mrb[0].mxu0
    %v478 = vpop.f32.mrb[0].mxu0
    %v479 = vadd.f32 %v143, %v478
    %v480 = vpop.f32.mrb[0].mxu0
    %481 = vmatprep.mubr.bf16.mxu0 0
    %482 = vmatmul.mubr.bf16.gmra.mrb[0].mxu0 %v281
    %v483 = vpop.f32.mrb[0].mxu0
    %v484 = vadd.f32 %v143, %v483
    %v485 = vpop.f32.mrb[0].mxu0
    %v486 = vpop.f32.mrb[0].mxu0
    %v487 = vadd.f32 %v143, %v486
    %v488 = vpop.f32.mrb[0].mxu0
    %489 = vmatprep.mubr.bf16.mxu0 0
    %490 = vmatmul.mubr.bf16.gmra.mrb[0].mxu0 %v282
    %v491 = vpop.f32.mrb[0].mxu0
    %v492 = vadd.f32 %v143, %v491
    %v493 = vpop.f32.mrb[0].mxu0
    %v494 = vpop.f32.mrb[0].mxu0
    %v495 = vadd.f32 %v143, %v494
    %v496 = vpop.f32.mrb[0].mxu0
    %497 = vmatprep.mubr.bf16.mxu0 0
    %498 = vmatmul.mubr.bf16.gmra.mrb[0].mxu0 %v283
    %v499 = vpop.f32.mrb[0].mxu0
    %v500 = vadd.f32 %v143, %v499
    %v501 = vpop.f32.mrb[0].mxu0
    %v502 = vpop.f32.mrb[0].mxu0
    %v503 = vadd.f32 %v143, %v502
    %v504 = vpop.f32.mrb[0].mxu0
    %505 = vmatprep.mubr.bf16.mxu0 0
    %506 = vmatmul.mubr.bf16.gmra.mrb[0].mxu0 %v284
    %v507 = vpop.f32.mrb[0].mxu0
    %v508 = vadd.f32 %v143, %v507
    %v509 = vpop.f32.mrb[0].mxu0
    %v510 = vpop.f32.mrb[0].mxu0
    %v511 = vadd.f32 %v143, %v510
    %v512 = vpop.f32.mrb[0].mxu0
    %513 = vmatprep.mubr.bf16.mxu0 0
    %514 = vmatmul.mubr.bf16.gmra.mrb[0].mxu0 %v285
    %v515 = vpop.f32.mrb[0].mxu0
    %v516 = vadd.f32 %v143, %v515
    %v517 = vpop.f32.mrb[0].mxu0
    %v518 = vpop.f32.mrb[0].mxu0
    %v519 = vadd.f32 %v143, %v518
    %v520 = vpop.f32.mrb[0].mxu0
    %521 = vmatprep.mubr.bf16.mxu0 0
    %522 = vmatmul.mubr.bf16.gmra.mrb[0].mxu0 %v286
    %v523 = vpop.f32.mrb[0].mxu0
    %v524 = vadd.f32 %v143, %v523
    %v525 = vpop.f32.mrb[0].mxu0
    %v526 = vpop.f32.mrb[0].mxu0
    %v527 = vadd.f32 %v143, %v526
    %v528 = vpop.f32.mrb[0].mxu0
    %529 = vmatprep.mubr.bf16.mxu0 0
    %530 = vmatmul.mubr.bf16.gmra.mrb[0].mxu0 %v287
    %v531 = vpop.f32.mrb[0].mxu0
    %v532 = vadd.f32 %v143, %v531
    %v533 = vpop.f32.mrb[0].mxu0
    %v534 = vpop.f32.mrb[0].mxu0
    %v535 = vadd.f32 %v143, %v534
    %v536 = vpop.f32.mrb[0].mxu0
    %537 = vmatprep.mubr.bf16.mxu0 0
    %538 = vmatmul.mubr.bf16.gmra.mrb[0].mxu0 %v288
    %v539 = vpop.f32.mrb[0].mxu0
    %v540 = vadd.f32 %v143, %v539
    %v541 = vpop.f32.mrb[0].mxu0
    %v542 = vpop.f32.mrb[0].mxu0
    %v543 = vadd.f32 %v143, %v542
    %v544 = vpop.f32.mrb[0].mxu0
    %545 = vmatprep.mubr.bf16.mxu0 0
    %546 = vmatmul.mubr.bf16.gmra.mrb[0].mxu0 %v289
    %v547 = vpop.f32.mrb[0].mxu0
    %v548 = vadd.f32 %v143, %v547
    %v549 = vpop.f32.mrb[0].mxu0
    %v550 = vpop.f32.mrb[0].mxu0
    %v551 = vadd.f32 %v143, %v550
    %v552 = vpop.f32.mrb[0].mxu0
    %553 = vmatprep.mubr.bf16.mxu0 0
    %554 = vmatmul.mubr.bf16.gmra.mrb[0].mxu0 %v290
    %v555 = vpop.f32.mrb[0].mxu0
    %v556 = vadd.f32 %v143, %v555
    %v557 = vpop.f32.mrb[0].mxu0
    %v558 = vpop.f32.mrb[0].mxu0
    %v559 = vadd.f32 %v143, %v558
    %v560 = vpop.f32.mrb[0].mxu0
    %561 = vmatprep.mubr.bf16.mxu0 0
    %562 = vmatmul.mubr.bf16.gmra.mrb[0].mxu0 %v291
    %v563 = vpop.f32.mrb[0].mxu0
    %v564 = vadd.f32 %v143, %v563
    %v565 = vpop.f32.mrb[0].mxu0
    %v566 = vpop.f32.mrb[0].mxu0
    %v567 = vadd.f32 %v143, %v566
    %v568 = vpop.f32.mrb[0].mxu0
    %569 = vmatprep.mubr.bf16.mxu0 0
    %570 = vmatmul.mubr.bf16.gmra.mrb[0].mxu0 %v292
    %v571 = vpop.f32.mrb[0].mxu0
    %v572 = vadd.f32 %v143, %v571
    %v573 = vpop.f32.mrb[0].mxu0
    %v574 = vpop.f32.mrb[0].mxu0
    %v575 = vadd.f32 %v143, %v574
    %v576 = vpop.f32.mrb[0].mxu0
    %577 = vmatprep.mubr.bf16.mxu0 0
    %578 = vmatmul.mubr.bf16.gmra.mrb[0].mxu0 %v293
    %v579 = vpop.f32.mrb[0].mxu0
    %v580 = vadd.f32 %v143, %v579
    %v581 = vpop.f32.mrb[0].mxu0
    %v582 = vpop.f32.mrb[0].mxu0
    %v583 = vadd.f32 %v143, %v582
    %v584 = vpop.f32.mrb[0].mxu0
    %585 = vmatprep.mubr.bf16.mxu0 0
    %586 = vmatmul.mubr.bf16.gmra.mrb[0].mxu0 %v294
    %v587 = vpop.f32.mrb[0].mxu0
    %v588 = vadd.f32 %v143, %v587
    %v589 = vpop.f32.mrb[0].mxu0
    %v590 = vpop.f32.mrb[0].mxu0
    %v591 = vadd.f32 %v143, %v590
    %v592 = vpop.f32.mrb[0].mxu0
    %593 = vmatprep.mubr.bf16.mxu0 0
    %594 = vmatmul.mubr.bf16.gmra.mrb[0].mxu0 %v295
    %v595 = vpop.f32.mrb[0].mxu0
    %v596 = vadd.f32 %v143, %v595
    %v597 = vpop.f32.mrb[0].mxu0
    %v598 = vpop.f32.mrb[0].mxu0
    %v599 = vadd.f32 %v143, %v598
    %v600 = vpop.f32.mrb[0].mxu0
    %601 = vmatprep.mubr.bf16.mxu0 0
    %602 = vmatmul.mubr.bf16.gmra.mrb[0].mxu0 %v296
    %v603 = vpop.f32.mrb[0].mxu0
    %v604 = vadd.f32 %v143, %v603
    %v605 = vpop.f32.mrb[0].mxu0
    %v606 = vpop.f32.mrb[0].mxu0
    %v607 = vadd.f32 %v143, %v606
    %v608 = vpop.f32.mrb[0].mxu0
    %609 = vmatprep.mubr.bf16.mxu0 0
    %610 = vmatmul.mubr.bf16.gmra.mrb[0].mxu0 %v297
    %v611 = vpop.f32.mrb[0].mxu0
    %v612 = vadd.f32 %v143, %v611
    %v613 = vpop.f32.mrb[0].mxu0
    %v614 = vpop.f32.mrb[0].mxu0
    %v615 = vadd.f32 %v143, %v614
    %v616 = vpop.f32.mrb[0].mxu0
    %617 = vmatprep.mubr.bf16.mxu0 0
    %618 = vmatmul.mubr.bf16.gmra.mrb[0].mxu0 %v298
    %v619 = vpop.f32.mrb[0].mxu0
    %v620 = vadd.f32 %v143, %v619
    %v621 = vpop.f32.mrb[0].mxu0
    %v622 = vpop.f32.mrb[0].mxu0
    %v623 = vadd.f32 %v143, %v622
    %v624 = vpop.f32.mrb[0].mxu0
    %625 = vmatprep.mubr.bf16.mxu0 0
    %626 = vmatmul.mubr.bf16.gmra.mrb[0].mxu0 %v299
    %v627 = vpop.f32.mrb[0].mxu0
    %v628 = vadd.f32 %v143, %v627
    %v629 = vpop.f32.mrb[0].mxu0
    %v630 = vpop.f32.mrb[0].mxu0
    %v631 = vadd.f32 %v143, %v630
    %v632 = vpop.f32.mrb[0].mxu0
    %633 = vmatprep.mubr.bf16.mxu0 0
    %634 = vmatmul.mubr.bf16.gmra.mrb[0].mxu0 %v300
    %v635 = vpop.f32.mrb[0].mxu0
    %v636 = vadd.f32 %v143, %v635
    %v637 = vpop.f32.mrb[0].mxu0
    %v638 = vpop.f32.mrb[0].mxu0
    %v639 = vadd.f32 %v143, %v638
    %v640 = vpop.f32.mrb[0].mxu0
    %641 = vmatprep.mubr.bf16.mxu0 0
    %642 = vmatmul.mubr.bf16.gmra.mrb[0].mxu0 %v301
    %v643 = vpop.f32.mrb[0].mxu0
    %v644 = vadd.f32 %v143, %v643
    %v645 = vpop.f32.mrb[0].mxu0
    %v646 = vpop.f32.mrb[0].mxu0
    %v647 = vadd.f32 %v143, %v646
    %v648 = vpop.f32.mrb[0].mxu0
    %649 = vmatprep.mubr.bf16.mxu0 0
    %650 = vmatmul.mubr.bf16.gmra.mrb[0].mxu0 %v302
    %v651 = vpop.f32.mrb[0].mxu0
    %v652 = vadd.f32 %v143, %v651
    %v653 = vpop.f32.mrb[0].mxu0
    %v654 = vpop.f32.mrb[0].mxu0
    %v655 = vadd.f32 %v143, %v654
    %v656 = vpop.f32.mrb[0].mxu0
    %657 = vmatprep.mubr.bf16.mxu0 0
    %658 = vmatmul.mubr.bf16.gmra.mrb[0].mxu0 %v303
    %v659 = vpop.f32.mrb[0].mxu0
    %v660 = vadd.f32 %v143, %v659
    %v661 = vpop.f32.mrb[0].mxu0
    %v662 = vpop.f32.mrb[0].mxu0
    %v663 = vadd.f32 %v143, %v662
    %v664 = vpop.f32.mrb[0].mxu0
    %665 = vmatprep.mubr.bf16.mxu0 0
    %666 = vmatmul.mubr.bf16.gmra.mrb[0].mxu0 %v304
    %v667 = vpop.f32.mrb[0].mxu0
    %v668 = vadd.f32 %v143, %v667
    %v669 = vpop.f32.mrb[0].mxu0
    %v670 = vpop.f32.mrb[0].mxu0
    %v671 = vadd.f32 %v143, %v670
    %v672 = vpop.f32.mrb[0].mxu0
    %673 = vdwg.mxu0
    %v674 = vxor.u32 %v420, 2147483648
    %v675 = vxor.u32 %v423, 2147483648
    %v676 = vxor.u32 %v428, 2147483648
    %v677 = vxor.u32 %v431, 2147483648
    %v678 = vxor.u32 %v436, 2147483648
    %v679 = vxor.u32 %v439, 2147483648
    %v680 = vxor.u32 %v444, 2147483648
    %v681 = vxor.u32 %v447, 2147483648
    %v682 = vxor.u32 %v452, 2147483648
    %v683 = vxor.u32 %v455, 2147483648
    %v684 = vxor.u32 %v460, 2147483648
    %v685 = vxor.u32 %v463, 2147483648
    %v686 = vxor.u32 %v468, 2147483648
    %v687 = vxor.u32 %v471, 2147483648
    %v688 = vxor.u32 %v476, 2147483648
    %v689 = vxor.u32 %v479, 2147483648
    %v690 = vxor.u32 %v484, 2147483648
    %v691 = vxor.u32 %v487, 2147483648
    %v692 = vxor.u32 %v492, 2147483648
    %v693 = vxor.u32 %v495, 2147483648
    %v694 = vxor.u32 %v500, 2147483648
    %v695 = vxor.u32 %v503, 2147483648
    %v696 = vxor.u32 %v508, 2147483648
    %v697 = vxor.u32 %v511, 2147483648
    %v698 = vxor.u32 %v516, 2147483648
    %v699 = vxor.u32 %v519, 2147483648
    %v700 = vxor.u32 %v524, 2147483648
    %v701 = vxor.u32 %v527, 2147483648
    %v702 = vxor.u32 %v532, 2147483648
    %v703 = vxor.u32 %v535, 2147483648
    %v704 = vxor.u32 %v540, 2147483648
    %v705 = vxor.u32 %v543, 2147483648
    %v706 = vxor.u32 %v548, 2147483648
    %v707 = vxor.u32 %v551, 2147483648
    %v708 = vxor.u32 %v556, 2147483648
    %v709 = vxor.u32 %v559, 2147483648
    %v710 = vxor.u32 %v564, 2147483648
    %v711 = vxor.u32 %v567, 2147483648
    %v712 = vxor.u32 %v572, 2147483648
    %v713 = vxor.u32 %v575, 2147483648
    %v714 = vxor.u32 %v580, 2147483648
    %v715 = vxor.u32 %v583, 2147483648
    %v716 = vxor.u32 %v588, 2147483648
    %v717 = vxor.u32 %v591, 2147483648
    %v718 = vxor.u32 %v596, 2147483648
    %v719 = vxor.u32 %v599, 2147483648
    %v720 = vxor.u32 %v604, 2147483648
    %v721 = vxor.u32 %v607, 2147483648
    %v722 = vxor.u32 %v612, 2147483648
    %v723 = vxor.u32 %v615, 2147483648
    %v724 = vxor.u32 %v620, 2147483648
    %v725 = vxor.u32 %v623, 2147483648
    %v726 = vxor.u32 %v628, 2147483648
    %v727 = vxor.u32 %v631, 2147483648
    %v728 = vxor.u32 %v636, 2147483648
    %v729 = vxor.u32 %v639, 2147483648
    %v730 = vxor.u32 %v644, 2147483648
    %v731 = vxor.u32 %v647, 2147483648
    %v732 = vxor.u32 %v652, 2147483648
    %v733 = vxor.u32 %v655, 2147483648
    %v734 = vxor.u32 %v660, 2147483648
    %v735 = vxor.u32 %v663, 2147483648
    %v736 = vxor.u32 %v668, 2147483648
    %v737 = vxor.u32 %v671, 2147483648
    %v738 = vmul.f32 %v674, 1.442695
    %v739 = vpow.pop %v738
    %v740 = vmul.f32 %v675, 1.442695
    %v741 = vpow.pop %v740
    %v742 = vmul.f32 %v676, 1.442695
    %v743 = vpow.pop %v742
    %v744 = vmul.f32 %v677, 1.442695
    %v745 = vpow.pop %v744
    %v746 = vmul.f32 %v678, 1.442695
    %v747 = vpow.pop %v746
    %v748 = vmul.f32 %v679, 1.442695
    %v749 = vpow.pop %v748
    %v750 = vmul.f32 %v680, 1.442695
    %v751 = vpow.pop %v750
    %v752 = vmul.f32 %v681, 1.442695
    %v753 = vpow.pop %v752
    %v754 = vmul.f32 %v682, 1.442695
    %v755 = vpow.pop %v754
    %v756 = vmul.f32 %v683, 1.442695
    %v757 = vpow.pop %v756
    %v758 = vmul.f32 %v684, 1.442695
    %v759 = vpow.pop %v758
    %v760 = vmul.f32 %v685, 1.442695
    %v761 = vpow.pop %v760
    %v762 = vmul.f32 %v686, 1.442695
    %v763 = vpow.pop %v762
    %v764 = vmul.f32 %v687, 1.442695
    %v765 = vpow.pop %v764
    %v766 = vmul.f32 %v688, 1.442695
    %v767 = vpow.pop %v766
    %v768 = vmul.f32 %v689, 1.442695
    %v769 = vpow.pop %v768
    %v770 = vmul.f32 %v690, 1.442695
    %v771 = vpow.pop %v770
    %v772 = vmul.f32 %v691, 1.442695
    %v773 = vpow.pop %v772
    %v774 = vmul.f32 %v692, 1.442695
    %v775 = vpow.pop %v774
    %v776 = vmul.f32 %v693, 1.442695
    %v777 = vpow.pop %v776
    %v778 = vmul.f32 %v694, 1.442695
    %v779 = vpow.pop %v778
    %v780 = vmul.f32 %v695, 1.442695
    %v781 = vpow.pop %v780
    %v782 = vmul.f32 %v696, 1.442695
    %v783 = vpow.pop %v782
    %v784 = vmul.f32 %v697, 1.442695
    %v785 = vpow.pop %v784
    %v786 = vmul.f32 %v698, 1.442695
    %v787 = vpow.pop %v786
    %v788 = vmul.f32 %v699, 1.442695
    %v789 = vpow.pop %v788
    %v790 = vmul.f32 %v700, 1.442695
    %v791 = vpow.pop %v790
    %v792 = vmul.f32 %v701, 1.442695
    %v793 = vpow.pop %v792
    %v794 = vmul.f32 %v702, 1.442695
    %v795 = vpow.pop %v794
    %v796 = vmul.f32 %v703, 1.442695
    %v797 = vpow.pop %v796
    %v798 = vmul.f32 %v704, 1.442695
    %v799 = vpow.pop %v798
    %v800 = vmul.f32 %v705, 1.442695
    %v801 = vpow.pop %v800
    %v802 = vmul.f32 %v706, 1.442695
    %v803 = vpow.pop %v802
    %v804 = vmul.f32 %v707, 1.442695
    %v805 = vpow.pop %v804
    %v806 = vmul.f32 %v708, 1.442695
    %v807 = vpow.pop %v806
    %v808 = vmul.f32 %v709, 1.442695
    %v809 = vpow.pop %v808
    %v810 = vmul.f32 %v710, 1.442695
    %v811 = vpow.pop %v810
    %v812 = vmul.f32 %v711, 1.442695
    %v813 = vpow.pop %v812
    %v814 = vmul.f32 %v712, 1.442695
    %v815 = vpow.pop %v814
    %v816 = vmul.f32 %v713, 1.442695
    %v817 = vpow.pop %v816
    %v818 = vmul.f32 %v714, 1.442695
    %v819 = vpow.pop %v818
    %v820 = vmul.f32 %v715, 1.442695
    %v821 = vpow.pop %v820
    %v822 = vmul.f32 %v716, 1.442695
    %v823 = vpow.pop %v822
    %v824 = vmul.f32 %v717, 1.442695
    %v825 = vpow.pop %v824
    %v826 = vmul.f32 %v718, 1.442695
    %v827 = vpow.pop %v826
    %v828 = vmul.f32 %v719, 1.442695
    %v829 = vpow.pop %v828
    %v830 = vmul.f32 %v720, 1.442695
    %v831 = vpow.pop %v830
    %v832 = vmul.f32 %v721, 1.442695
    %v833 = vpow.pop %v832
    %v834 = vmul.f32 %v722, 1.442695
    %v835 = vpow.pop %v834
    %v836 = vmul.f32 %v723, 1.442695
    %v837 = vpow.pop %v836
    %v838 = vmul.f32 %v724, 1.442695
    %v839 = vpow.pop %v838
    %v840 = vmul.f32 %v725, 1.442695
    %v841 = vpow.pop %v840
    %v842 = vmul.f32 %v726, 1.442695
    %v843 = vpow.pop %v842
    %v844 = vmul.f32 %v727, 1.442695
    %v845 = vpow.pop %v844
    %v846 = vmul.f32 %v728, 1.442695
    %v847 = vpow.pop %v846
    %v848 = vmul.f32 %v729, 1.442695
    %v849 = vpow.pop %v848
    %v850 = vmul.f32 %v730, 1.442695
    %v851 = vpow.pop %v850
    %v852 = vmul.f32 %v731, 1.442695
    %v853 = vpow.pop %v852
    %v854 = vmul.f32 %v732, 1.442695
    %v855 = vpow.pop %v854
    %v856 = vmul.f32 %v733, 1.442695
    %v857 = vpow.pop %v856
    %v858 = vmul.f32 %v734, 1.442695
    %v859 = vpow.pop %v858
    %v860 = vmul.f32 %v735, 1.442695
    %v861 = vpow.pop %v860
    %v862 = vmul.f32 %v736, 1.442695
    %v863 = vpow.pop %v862
    %v864 = vmul.f32 %v737, 1.442695
    %v865 = vpow.pop %v864
    %v866 = vadd.f32 %v739, 1.0
    %v867 = vadd.f32 %v741, 1.0
    %v868 = vadd.f32 %v743, 1.0
    %v869 = vadd.f32 %v745, 1.0
    %v870 = vadd.f32 %v747, 1.0
    %v871 = vadd.f32 %v749, 1.0
    %v872 = vadd.f32 %v751, 1.0
    %v873 = vadd.f32 %v753, 1.0
    %v874 = vadd.f32 %v755, 1.0
    %v875 = vadd.f32 %v757, 1.0
    %v876 = vadd.f32 %v759, 1.0
    %v877 = vadd.f32 %v761, 1.0
    %v878 = vadd.f32 %v763, 1.0
    %v879 = vadd.f32 %v765, 1.0
    %v880 = vadd.f32 %v767, 1.0
    %v881 = vadd.f32 %v769, 1.0
    %v882 = vadd.f32 %v771, 1.0
    %v883 = vadd.f32 %v773, 1.0
    %v884 = vadd.f32 %v775, 1.0
    %v885 = vadd.f32 %v777, 1.0
    %v886 = vadd.f32 %v779, 1.0
    %v887 = vadd.f32 %v781, 1.0
    %v888 = vadd.f32 %v783, 1.0
    %v889 = vadd.f32 %v785, 1.0
    %v890 = vadd.f32 %v787, 1.0
    %v891 = vadd.f32 %v789, 1.0
    %v892 = vadd.f32 %v791, 1.0
    %v893 = vadd.f32 %v793, 1.0
    %v894 = vadd.f32 %v795, 1.0
    %v895 = vadd.f32 %v797, 1.0
    %v896 = vadd.f32 %v799, 1.0
    %v897 = vadd.f32 %v801, 1.0
    %v898 = vadd.f32 %v803, 1.0
    %v899 = vadd.f32 %v805, 1.0
    %v900 = vadd.f32 %v807, 1.0
    %v901 = vadd.f32 %v809, 1.0
    %v902 = vadd.f32 %v811, 1.0
    %v903 = vadd.f32 %v813, 1.0
    %v904 = vadd.f32 %v815, 1.0
    %v905 = vadd.f32 %v817, 1.0
    %v906 = vadd.f32 %v819, 1.0
    %v907 = vadd.f32 %v821, 1.0
    %v908 = vadd.f32 %v823, 1.0
    %v909 = vadd.f32 %v825, 1.0
    %v910 = vadd.f32 %v827, 1.0
    %v911 = vadd.f32 %v829, 1.0
    %v912 = vadd.f32 %v831, 1.0
    %v913 = vadd.f32 %v833, 1.0
    %v914 = vadd.f32 %v835, 1.0
    %v915 = vadd.f32 %v837, 1.0
    %v916 = vadd.f32 %v839, 1.0
    %v917 = vadd.f32 %v841, 1.0
    %v918 = vadd.f32 %v843, 1.0
    %v919 = vadd.f32 %v845, 1.0
    %v920 = vadd.f32 %v847, 1.0
    %v921 = vadd.f32 %v849, 1.0
    %v922 = vadd.f32 %v851, 1.0
    %v923 = vadd.f32 %v853, 1.0
    %v924 = vadd.f32 %v855, 1.0
    %v925 = vadd.f32 %v857, 1.0
    %v926 = vadd.f32 %v859, 1.0
    %v927 = vadd.f32 %v861, 1.0
    %v928 = vadd.f32 %v863, 1.0
    %v929 = vadd.f32 %v865, 1.0
    %v930 = vrcp.pop %v866
    %v931 = vmul.f32 1.0, %v930
    %v932 = vrcp.pop %v867
    %v933 = vmul.f32 1.0, %v932
    %v934 = vrcp.pop %v868
    %v935 = vmul.f32 1.0, %v934
    %v936 = vrcp.pop %v869
    %v937 = vmul.f32 1.0, %v936
    %v938 = vrcp.pop %v870
    %v939 = vmul.f32 1.0, %v938
    %v940 = vrcp.pop %v871
    %v941 = vmul.f32 1.0, %v940
    %v942 = vrcp.pop %v872
    %v943 = vmul.f32 1.0, %v942
    %v944 = vrcp.pop %v873
    %v945 = vmul.f32 1.0, %v944
    %v946 = vrcp.pop %v874
    %v947 = vmul.f32 1.0, %v946
    %v948 = vrcp.pop %v875
    %v949 = vmul.f32 1.0, %v948
    %v950 = vrcp.pop %v876
    %v951 = vmul.f32 1.0, %v950
    %v952 = vrcp.pop %v877
    %v953 = vmul.f32 1.0, %v952
    %v954 = vrcp.pop %v878
    %v955 = vmul.f32 1.0, %v954
    %v956 = vrcp.pop %v879
    %v957 = vmul.f32 1.0, %v956
    %v958 = vrcp.pop %v880
    %v959 = vmul.f32 1.0, %v958
    %v960 = vrcp.pop %v881
    %v961 = vmul.f32 1.0, %v960
    %v962 = vrcp.pop %v882
    %v963 = vmul.f32 1.0, %v962
    %v964 = vrcp.pop %v883
    %v965 = vmul.f32 1.0, %v964
    %v966 = vrcp.pop %v884
    %v967 = vmul.f32 1.0, %v966
    %v968 = vrcp.pop %v885
    %v969 = vmul.f32 1.0, %v968
    %v970 = vrcp.pop %v886
    %v971 = vmul.f32 1.0, %v970
    %v972 = vrcp.pop %v887
    %v973 = vmul.f32 1.0, %v972
    %v974 = vrcp.pop %v888
    %v975 = vmul.f32 1.0, %v974
    %v976 = vrcp.pop %v889
    %v977 = vmul.f32 1.0, %v976
    %v978 = vrcp.pop %v890
    %v979 = vmul.f32 1.0, %v978
    %v980 = vrcp.pop %v891
    %v981 = vmul.f32 1.0, %v980
    %v982 = vrcp.pop %v892
    %v983 = vmul.f32 1.0, %v982
    %v984 = vrcp.pop %v893
    %v985 = vmul.f32 1.0, %v984
    %v986 = vrcp.pop %v894
    %v987 = vmul.f32 1.0, %v986
    %v988 = vrcp.pop %v895
    %v989 = vmul.f32 1.0, %v988
    %v990 = vrcp.pop %v896
    %v991 = vmul.f32 1.0, %v990
    %v992 = vrcp.pop %v897
    %v993 = vmul.f32 1.0, %v992
    %v994 = vrcp.pop %v898
    %v995 = vmul.f32 1.0, %v994
    %v996 = vrcp.pop %v899
    %v997 = vmul.f32 1.0, %v996
    %v998 = vrcp.pop %v900
    %v999 = vmul.f32 1.0, %v998
    %v1000 = vrcp.pop %v901
    %v1001 = vmul.f32 1.0, %v1000
    %v1002 = vrcp.pop %v902
    %v1003 = vmul.f32 1.0, %v1002
    %v1004 = vrcp.pop %v903
    %v1005 = vmul.f32 1.0, %v1004
    %v1006 = vrcp.pop %v904
    %v1007 = vmul.f32 1.0, %v1006
    %v1008 = vrcp.pop %v905
    %v1009 = vmul.f32 1.0, %v1008
    %v1010 = vrcp.pop %v906
    %v1011 = vmul.f32 1.0, %v1010
    %v1012 = vrcp.pop %v907
    %v1013 = vmul.f32 1.0, %v1012
    %v1014 = vrcp.pop %v908
    %v1015 = vmul.f32 1.0, %v1014
    %v1016 = vrcp.pop %v909
    %v1017 = vmul.f32 1.0, %v1016
    %v1018 = vrcp.pop %v910
    %v1019 = vmul.f32 1.0, %v1018
    %v1020 = vrcp.pop %v911
    %v1021 = vmul.f32 1.0, %v1020
    %v1022 = vrcp.pop %v912
    %v1023 = vmul.f32 1.0, %v1022
    %v1024 = vrcp.pop %v913
    %v1025 = vmul.f32 1.0, %v1024
    %v1026 = vrcp.pop %v914
    %v1027 = vmul.f32 1.0, %v1026
    %v1028 = vrcp.pop %v915
    %v1029 = vmul.f32 1.0, %v1028
    %v1030 = vrcp.pop %v916
    %v1031 = vmul.f32 1.0, %v1030
    %v1032 = vrcp.pop %v917
    %v1033 = vmul.f32 1.0, %v1032
    %v1034 = vrcp.pop %v918
    %v1035 = vmul.f32 1.0, %v1034
    %v1036 = vrcp.pop %v919
    %v1037 = vmul.f32 1.0, %v1036
    %v1038 = vrcp.pop %v920
    %v1039 = vmul.f32 1.0, %v1038
    %v1040 = vrcp.pop %v921
    %v1041 = vmul.f32 1.0, %v1040
    %v1042 = vrcp.pop %v922
    %v1043 = vmul.f32 1.0, %v1042
    %v1044 = vrcp.pop %v923
    %v1045 = vmul.f32 1.0, %v1044
    %v1046 = vrcp.pop %v924
    %v1047 = vmul.f32 1.0, %v1046
    %v1048 = vrcp.pop %v925
    %v1049 = vmul.f32 1.0, %v1048
    %v1050 = vrcp.pop %v926
    %v1051 = vmul.f32 1.0, %v1050
    %v1052 = vrcp.pop %v927
    %v1053 = vmul.f32 1.0, %v1052
    %v1054 = vrcp.pop %v928
    %v1055 = vmul.f32 1.0, %v1054
    %v1056 = vrcp.pop %v929
    %v1057 = vmul.f32 1.0, %v1056
    %v1058 = vmul.f32 %v420, %v931
    %v1059 = vmul.f32 %v423, %v933
    %v1060 = vmul.f32 %v428, %v935
    %v1061 = vmul.f32 %v431, %v937
    %v1062 = vmul.f32 %v436, %v939
    %v1063 = vmul.f32 %v439, %v941
    %v1064 = vmul.f32 %v444, %v943
    %v1065 = vmul.f32 %v447, %v945
    %v1066 = vmul.f32 %v452, %v947
    %v1067 = vmul.f32 %v455, %v949
    %v1068 = vmul.f32 %v460, %v951
    %v1069 = vmul.f32 %v463, %v953
    %v1070 = vmul.f32 %v468, %v955
    %v1071 = vmul.f32 %v471, %v957
    %v1072 = vmul.f32 %v476, %v959
    %v1073 = vmul.f32 %v479, %v961
    %v1074 = vmul.f32 %v484, %v963
    %v1075 = vmul.f32 %v487, %v965
    %v1076 = vmul.f32 %v492, %v967
    %v1077 = vmul.f32 %v495, %v969
    %v1078 = vmul.f32 %v500, %v971
    %v1079 = vmul.f32 %v503, %v973
    %v1080 = vmul.f32 %v508, %v975
    %v1081 = vmul.f32 %v511, %v977
    %v1082 = vmul.f32 %v516, %v979
    %v1083 = vmul.f32 %v519, %v981
    %v1084 = vmul.f32 %v524, %v983
    %v1085 = vmul.f32 %v527, %v985
    %v1086 = vmul.f32 %v532, %v987
    %v1087 = vmul.f32 %v535, %v989
    %v1088 = vmul.f32 %v540, %v991
    %v1089 = vmul.f32 %v543, %v993
    %v1090 = vmul.f32 %v548, %v995
    %v1091 = vmul.f32 %v551, %v997
    %v1092 = vmul.f32 %v556, %v999
    %v1093 = vmul.f32 %v559, %v1001
    %v1094 = vmul.f32 %v564, %v1003
    %v1095 = vmul.f32 %v567, %v1005
    %v1096 = vmul.f32 %v572, %v1007
    %v1097 = vmul.f32 %v575, %v1009
    %v1098 = vmul.f32 %v580, %v1011
    %v1099 = vmul.f32 %v583, %v1013
    %v1100 = vmul.f32 %v588, %v1015
    %v1101 = vmul.f32 %v591, %v1017
    %v1102 = vmul.f32 %v596, %v1019
    %v1103 = vmul.f32 %v599, %v1021
    %v1104 = vmul.f32 %v604, %v1023
    %v1105 = vmul.f32 %v607, %v1025
    %v1106 = vmul.f32 %v612, %v1027
    %v1107 = vmul.f32 %v615, %v1029
    %v1108 = vmul.f32 %v620, %v1031
    %v1109 = vmul.f32 %v623, %v1033
    %v1110 = vmul.f32 %v628, %v1035
    %v1111 = vmul.f32 %v631, %v1037
    %v1112 = vmul.f32 %v636, %v1039
    %v1113 = vmul.f32 %v639, %v1041
    %v1114 = vmul.f32 %v644, %v1043
    %v1115 = vmul.f32 %v647, %v1045
    %v1116 = vmul.f32 %v652, %v1047
    %v1117 = vmul.f32 %v655, %v1049
    %v1118 = vmul.f32 %v660, %v1051
    %v1119 = vmul.f32 %v663, %v1053
    %v1120 = vmul.f32 %v668, %v1055
    %v1121 = vmul.f32 %v671, %v1057
    %v1122 = vld [vmem:[#allocation7] sm:$0xff]
    %v1123 = vld [vmem:[#allocation7 + $0x8] sm:$0xff]
    %v1124 = vld [vmem:[#allocation7 + $0x10] sm:$0xff]
    %v1125 = vld [vmem:[#allocation7 + $0x18] sm:$0xff]
    %1126 = vmatprep.subr.mxu0 0.0
    %1127 = vmatpush1.msra.mxu0 %v1058
    %1128 = vmatprep.subr.mxu0 0.0
    %1129 = vmatpush1.msra.mxu0 %v1059
    %1130 = vmatprep.subr.mxu0 0.0
    %1131 = vmatpush1.msra.mxu0 %v1060
    %1132 = vmatprep.subr.mxu0 0.0
    %1133 = vmatpush1.msra.mxu0 %v1061
    %1134 = vmatprep.subr.mxu0 0.0
    %1135 = vmatpush1.msra.mxu0 %v1062
    %1136 = vmatprep.subr.mxu0 0.0
    %1137 = vmatpush1.msra.mxu0 %v1063
    %1138 = vmatprep.subr.mxu0 0.0
    %1139 = vmatpush1.msra.mxu0 %v1064
    %1140 = vmatprep.subr.mxu0 0.0
    %1141 = vmatpush1.msra.mxu0 %v1065
    %1142 = vmatprep.subr.mxu0 0.0
    %1143 = vmatpush1.msra.mxu0 %v1066
    %1144 = vmatprep.subr.mxu0 0.0
    %1145 = vmatpush1.msra.mxu0 %v1067
    %1146 = vmatprep.subr.mxu0 0.0
    %1147 = vmatpush1.msra.mxu0 %v1068
    %1148 = vmatprep.subr.mxu0 0.0
    %1149 = vmatpush1.msra.mxu0 %v1069
    %1150 = vmatprep.subr.mxu0 0.0
    %1151 = vmatpush1.msra.mxu0 %v1070
    %1152 = vmatprep.subr.mxu0 0.0
    %1153 = vmatpush1.msra.mxu0 %v1071
    %1154 = vmatprep.subr.mxu0 0.0
    %1155 = vmatpush1.msra.mxu0 %v1072
    %1156 = vmatprep.subr.mxu0 0.0
    %1157 = vmatpush1.msra.mxu0 %v1073
    %1158 = vmatprep.subr.mxu0 0.0
    %1159 = vmatpush1.msra.mxu0 %v1074
    %1160 = vmatprep.subr.mxu0 0.0
    %1161 = vmatpush1.msra.mxu0 %v1075
    %1162 = vmatprep.subr.mxu0 0.0
    %1163 = vmatpush1.msra.mxu0 %v1076
    %1164 = vmatprep.subr.mxu0 0.0
    %1165 = vmatpush1.msra.mxu0 %v1077
    %1166 = vmatprep.subr.mxu0 0.0
    %1167 = vmatpush1.msra.mxu0 %v1078
    %1168 = vmatprep.subr.mxu0 0.0
    %1169 = vmatpush1.msra.mxu0 %v1079
    %1170 = vmatprep.subr.mxu0 0.0
    %1171 = vmatpush1.msra.mxu0 %v1080
    %1172 = vmatprep.subr.mxu0 0.0
    %1173 = vmatpush1.msra.mxu0 %v1081
    %1174 = vmatprep.subr.mxu0 0.0
    %1175 = vmatpush1.msra.mxu0 %v1082
    %1176 = vmatprep.subr.mxu0 0.0
    %1177 = vmatpush1.msra.mxu0 %v1083
    %1178 = vmatprep.subr.mxu0 0.0
    %1179 = vmatpush1.msra.mxu0 %v1084
    %1180 = vmatprep.subr.mxu0 0.0
    %1181 = vmatpush1.msra.mxu0 %v1085
    %1182 = vmatprep.subr.mxu0 0.0
    %1183 = vmatpush1.msra.mxu0 %v1086
    %1184 = vmatprep.subr.mxu0 0.0
    %1185 = vmatpush1.msra.mxu0 %v1087
    %1186 = vmatprep.subr.mxu0 0.0
    %1187 = vmatpush1.msra.mxu0 %v1088
    %1188 = vmatprep.subr.mxu0 0.0
    %1189 = vmatpush1.msra.mxu0 %v1089
    %1190 = vmatprep.mubr.f32.mxu0 %v1123
    %1191 = vmatmul.mubr.f32.gmra.mrb[0].mxu0 %v1122
    %v1192 = vpop.f32.mrb[0].mxu0
    %v1193 = vadd.f32 0.0, %v1192
    %v1194 = vpop.f32.mrb[0].mxu0
    %1195 = vdwg.mxu0
    %1196 = vmatprep.subr.mxu0 0.0
    %1197 = vmatpush1.msra.mxu0 %v1090
    %1198 = vmatprep.subr.mxu0 0.0
    %1199 = vmatpush1.msra.mxu0 %v1091
    %1200 = vmatprep.subr.mxu0 0.0
    %1201 = vmatpush1.msra.mxu0 %v1092
    %1202 = vmatprep.subr.mxu0 0.0
    %1203 = vmatpush1.msra.mxu0 %v1093
    %1204 = vmatprep.subr.mxu0 0.0
    %1205 = vmatpush1.msra.mxu0 %v1094
    %1206 = vmatprep.subr.mxu0 0.0
    %1207 = vmatpush1.msra.mxu0 %v1095
    %1208 = vmatprep.subr.mxu0 0.0
    %1209 = vmatpush1.msra.mxu0 %v1096
    %1210 = vmatprep.subr.mxu0 0.0
    %1211 = vmatpush1.msra.mxu0 %v1097
    %1212 = vmatprep.subr.mxu0 0.0
    %1213 = vmatpush1.msra.mxu0 %v1098
    %1214 = vmatprep.subr.mxu0 0.0
    %1215 = vmatpush1.msra.mxu0 %v1099
    %1216 = vmatprep.subr.mxu0 0.0
    %1217 = vmatpush1.msra.mxu0 %v1100
    %1218 = vmatprep.subr.mxu0 0.0
    %1219 = vmatpush1.msra.mxu0 %v1101
    %1220 = vmatprep.subr.mxu0 0.0
    %1221 = vmatpush1.msra.mxu0 %v1102
    %1222 = vmatprep.subr.mxu0 0.0
    %1223 = vmatpush1.msra.mxu0 %v1103
    %1224 = vmatprep.subr.mxu0 0.0
    %1225 = vmatpush1.msra.mxu0 %v1104
    %1226 = vmatprep.subr.mxu0 0.0
    %1227 = vmatpush1.msra.mxu0 %v1105
    %1228 = vmatprep.subr.mxu0 0.0
    %1229 = vmatpush1.msra.mxu0 %v1106
    %1230 = vmatprep.subr.mxu0 0.0
    %1231 = vmatpush1.msra.mxu0 %v1107
    %1232 = vmatprep.subr.mxu0 0.0
    %1233 = vmatpush1.msra.mxu0 %v1108
    %1234 = vmatprep.subr.mxu0 0.0
    %1235 = vmatpush1.msra.mxu0 %v1109
    %1236 = vmatprep.subr.mxu0 0.0
    %1237 = vmatpush1.msra.mxu0 %v1110
    %1238 = vmatprep.subr.mxu0 0.0
    %1239 = vmatpush1.msra.mxu0 %v1111
    %1240 = vmatprep.subr.mxu0 0.0
    %1241 = vmatpush1.msra.mxu0 %v1112
    %1242 = vmatprep.subr.mxu0 0.0
    %1243 = vmatpush1.msra.mxu0 %v1113
    %1244 = vmatprep.subr.mxu0 0.0
    %1245 = vmatpush1.msra.mxu0 %v1114
    %1246 = vmatprep.subr.mxu0 0.0
    %1247 = vmatpush1.msra.mxu0 %v1115
    %1248 = vmatprep.subr.mxu0 0.0
    %1249 = vmatpush1.msra.mxu0 %v1116
    %1250 = vmatprep.subr.mxu0 0.0
    %1251 = vmatpush1.msra.mxu0 %v1117
    %1252 = vmatprep.subr.mxu0 0.0
    %1253 = vmatpush1.msra.mxu0 %v1118
    %1254 = vmatprep.subr.mxu0 0.0
    %1255 = vmatpush1.msra.mxu0 %v1119
    %1256 = vmatprep.subr.mxu0 0.0
    %1257 = vmatpush1.msra.mxu0 %v1120
    %1258 = vmatprep.subr.mxu0 0.0
    %1259 = vmatpush1.msra.mxu0 %v1121
    %1260 = vmatprep.mubr.f32.mxu0 %v1125
    %1261 = vmatmul.mubr.f32.gmra.mrb[0].mxu0 %v1124
    %v1262 = vpop.f32.mrb[0].mxu0
    %v1263 = vadd.f32 %v1193, %v1262
    %v1264 = vpop.f32.mrb[0].mxu0
    %1265 = vdwg.mxu0
    %1266 = vst [vmem:[#allocation8] sm:$0xff] %v1263
    // Predicated region
    $region30: #{tpu_custom_call.1} parent=1 // pred_check
      _
    $region31: #{tpu_custom_call.1} parent=1 // pred_check_branch
      %1268 = sbr.rel (0) target = $region33
    $region32: #{tpu_custom_call.1} parent=1 // pred_region
      %s1270 = ssub.s32 128, 128
      %1271 = vsyncadd [#allocation4], %s1270
      %s1273 = sshll.u32 [#allocation8], 4
      %s1274 = int_to_ptr.vmem [resolvable:$true] %s1273
      %1276 = dma.vmem_to_hbm [thread:$0]  %s1274, 128, %s4, [#allocation4]
    $region33: #{tpu_custom_call.1} parent=1 // pred_fallthru
      _
    // Predicated region
    $region34: #{tpu_custom_call.1} parent=1 // pred_check
      _
    $region35: #{tpu_custom_call.1} parent=1 // pred_check_branch
      %1278 = sbr.rel (0) target = $region37
    $region36: #{tpu_custom_call.1} parent=1 // pred_region
      %1279 = dma.done [#allocation4], 128
    $region37: #{tpu_custom_call.1} parent=1 // pred_fallthru
      _
    %1280 = vsyncpa [#allocation3], 1
    %1281 = vsyncpa [#allocation6], 1
    %1282 = vsyncpa [#allocation4], 1

</llo_original>
